<compile_context>
chip_gen: v7x
topology: tpu7x:2x2x1
jax: 0.10.0
libtpu: 0.0.40
codegen_flags: <defaults>
</compile_context>

<pallas_src>
import functools
import math
import numpy as np
import jax
import jax.numpy as jnp
from jax.experimental import pallas as pl
from jax.experimental.pallas import tpu as pltpu

BLOCK_K_SIZE_MIN = 128   # hash-block granularity along in_features (lane width)
HASH_BLOCK_N = 128       # hash-block granularity along out_features
MAX_TILE = 256           # max TM/TN kernel tile (feeds the 2x256^2 MXU)
K_UNROLL = 4             # hashed K-blocks processed per grid step
_PRIME = 2_147_483_647   # Mersenne prime for the universal hash


# ------------------------------------------------------------------ hashing --
def make_hash_random_numbers(seed: int) -> np.ndarray:
    """Deterministic 'uhash' random numbers derived from the seed."""
    rng = np.random.RandomState(seed)
    return rng.randint(1, _PRIME, size=(4,)).astype(np.int64)


def uhash_idx_table(random_numbers, num_n_blocks, num_k_blocks, num_red_k_blocks):
    """idx[n_blk, k_blk] in [0, num_red_k_blocks): which reduced-K block to use."""
    r0, r1, r2, _ = [int(v) for v in random_numbers]
    n_idx = np.arange(num_n_blocks, dtype=np.int64)[:, None]
    k_idx = np.arange(num_k_blocks, dtype=np.int64)[None, :]
    h = ((r0 * k_idx + r1 * n_idx + r2) % _PRIME) % max(num_red_k_blocks, 1)
    return h.astype(np.int32)


def _pad_to(n, m):
    return (n + m - 1) // m * m


# ------------------------------------------------------------------- kernel --
def _ssl_matmul_kernel(idx_ref, x_ref, w_ref, b_ref, o_ref, acc_ref,
                       *, u_steps, v_steps, tk, n_sub, num_k_blocks):
    # grid = (N/TN, M/TM, K/(U*TK)); reduction axis last ("arbitrary").
    # idx_ref: (num_hash_entries,) int32 in SMEM (scalar prefetch, flattened 1D)
    # x_ref:   (TM, U*TK)     activations tile
    # w_ref:   (K_red, TN)    compressed weight strip for this j (streams once/j)
    # b_ref:   (1, TN)        bias strip
    # o_ref:   (TM, TN)       output tile (written only on the last k step)
    # acc_ref: (TM, TN) f32   VMEM scratch accumulator
    j = pl.program_id(0)          # N-tile index (outermost)
    k = pl.program_id(2)          # reduction-group step

    @pl.when(k == 0)
    def _():
        # Fold the bias into the accumulator initialization.
        acc_ref[...] = jnp.broadcast_to(
            b_ref[...].astype(jnp.float32), acc_ref.shape)

    # Statically unrolled U x V hashed gather + matmul. Each dot is
    # (TM, TK) x (TK, 128) because the hash granularity along N is 128.
    for u in range(u_steps):
        x_blk = x_ref[:, u * tk:(u + 1) * tk]                       # (TM, TK)
        for v in range(v_steps):
            flat = (j * v_steps + v) * num_k_blocks + k * u_steps + u
            off = pl.multiple_of(idx_ref[flat] * tk, 128)
            w_blk = w_ref[pl.ds(off, tk), pl.ds(v * n_sub, n_sub)]  # (TK, 128)
            acc_ref[:, pl.ds(v * n_sub, n_sub)] += jnp.dot(
                x_blk, w_blk, preferred_element_type=jnp.float32)

    @pl.when(k == pl.num_programs(2) - 1)
    def _():
        o_ref[...] = acc_ref[...].astype(o_ref.dtype)


def ssl_linear_pallas(x2d, weight_t, bias2d, idx_flat, *, tm, tn, tk,
                      u_steps, num_k_blocks):
    """x2d: (M, K_pad); weight_t: (K_red, N_pad) compressed weight (transposed);
    bias2d: (1, N_pad); idx_flat: flattened hash table (N_pad/128 * num_k_blocks,)."""
    M, K = x2d.shape
    K_red, N = weight_t.shape
    assert M % tm == 0 and N % tn == 0
    assert K == num_k_blocks * tk and num_k_blocks % u_steps == 0
    v_steps = tn // HASH_BLOCK_N

    grid = (N // tn, M // tm, num_k_blocks // u_steps)

    x_bytes = x2d.dtype.itemsize
    w_bytes = weight_t.dtype.itemsize
    # Single-buffer the weight strip only when double-buffering it is heavy
    # (v7x: 64 MiB physical VMEM); its block index changes only at j
    # boundaries, so the exposed DMA cost is one per N-strip.
    single_buf_w = (2 * K_red * tn * w_bytes) > (16 << 20)
    w_spec_kwargs = {}
    if single_buf_w:
        w_spec_kwargs["pipeline_mode"] = pl.Buffered(1)

    in_specs = [
        # activations: fresh (TM, U*TK) tile per (i, k)
        pl.BlockSpec((tm, u_steps * tk), lambda j, i, k, idx: (i, k)),
        # compressed weight strip: constant across (i, k) -> fetched once per j
        pl.BlockSpec((K_red, tn), lambda j, i, k, idx: (0, j), **w_spec_kwargs),
        # bias strip
        pl.BlockSpec((1, tn), lambda j, i, k, idx: (0, j)),
    ]
    out_spec = pl.BlockSpec((tm, tn), lambda j, i, k, idx: (i, j))

    grid_spec = pltpu.PrefetchScalarGridSpec(
        num_scalar_prefetch=1,
        grid=grid,
        in_specs=in_specs,
        out_specs=out_spec,
        scratch_shapes=[pltpu.VMEM((tm, tn), jnp.float32)],
    )

    # VMEM budget: double-buffered x / bias / output, weight strip (1- or
    # 2-deep) and the resident f32 accumulator.
    w_bufs = 1 if single_buf_w else 2
    est_vmem = (2 * tm * u_steps * tk * x_bytes
                + w_bufs * K_red * tn * w_bytes
                + 2 * tn * 4
                + 2 * tm * tn * x_bytes
                + tm * tn * 4)
    try:
        vmem_cap = pltpu.get_tpu_info().vmem_capacity_bytes
    except Exception:
        vmem_cap = 64 << 20   # conservative fallback = v7x physical VMEM
    cparams = dict(dimension_semantics=("parallel", "parallel", "arbitrary"))
    if est_vmem > (16 << 20):
        cparams["vmem_limit_bytes"] = int(min(1.5 * est_vmem, 0.75 * vmem_cap))

    kernel = functools.partial(
        _ssl_matmul_kernel, u_steps=u_steps, v_steps=v_steps, tk=tk,
        n_sub=HASH_BLOCK_N, num_k_blocks=num_k_blocks)

    return pl.pallas_call(
        kernel,
        out_shape=jax.ShapeDtypeStruct((M, N), x2d.dtype),
        grid_spec=grid_spec,
        compiler_params=pltpu.CompilerParams(**cparams),
    )(idx_flat, x2d, weight_t, bias2d)


# ------------------------------------------------------------------- module --
class SSLPallas:
    """JAX/Pallas port of the PyTorch SSL module (forward pass)."""

    def __init__(self, in_features, out_features, bias=True, redn_factor=2,
                 seed=1024, key=None):
        assert redn_factor > 0 and (redn_factor & (redn_factor - 1)) == 0
        self.in_features = in_features
        self.out_features = out_features
        self.redn_factor = redn_factor
        self.seed = seed
        self.red_in_features = _pad_to(
            max(in_features // redn_factor, 1), BLOCK_K_SIZE_MIN)

        key = jax.random.PRNGKey(0) if key is None else key
        kw, kb = jax.random.split(key, 2)

        # kaiming_uniform_(a=sqrt(5)) on (out, red_in) -> bound = 1/sqrt(fan_in)
        fan_in = self.red_in_features
        w_bound = 1.0 / math.sqrt(fan_in)
        self.weight = jax.random.uniform(
            kw, (out_features, self.red_in_features),
            minval=-w_bound, maxval=w_bound, dtype=jnp.float32)
        if bias:
            b_bound = 1.0 / math.sqrt(fan_in)
            self.bias = jax.random.uniform(
                kb, (out_features,), minval=-b_bound, maxval=b_bound,
                dtype=jnp.float32)
        else:
            self.bias = None

        # TODO(synk): original repo's Triton `ssl_linear` / `HasherFactory` were
        # not provided; the universal hash is a deterministic re-implementation.
        self.random_numbers = make_hash_random_numbers(seed)

        # Padded problem sizes (done ONCE here, not per call).
        tk = BLOCK_K_SIZE_MIN
        num_k_blocks0 = max(1, -(-in_features // tk))
        self.u_steps = min(K_UNROLL, num_k_blocks0)
        self.num_k_blocks = -(-num_k_blocks0 // self.u_steps) * self.u_steps
        self._K_pad = self.num_k_blocks * tk
        self._N_pad = _pad_to(out_features, HASH_BLOCK_N)
        num_n_hash_blocks = self._N_pad // HASH_BLOCK_N
        num_red_k_blocks = self.red_in_features // tk

        idx2d = uhash_idx_table(self.random_numbers, num_n_hash_blocks,
                                self.num_k_blocks, num_red_k_blocks)
        self.idx_flat = jnp.asarray(idx2d.reshape(-1))      # 1D for SMEM prefetch

        # Zero-padded parameters used by the kernel; the compressed weight is
        # stored transposed (K_red, N_pad) so the hashed gather is an aligned
        # sublane slice and the matmul is a natural (M,K)x(K,N).
        self._weight_pad = jnp.zeros(
            (self._N_pad, self.red_in_features),
            jnp.float32).at[:out_features].set(self.weight)
        self._weight_pad_t = jnp.asarray(self._weight_pad.T)
        b = self.bias if self.bias is not None else jnp.zeros(
            (out_features,), jnp.float32)
        self._bias_pad2d = jnp.zeros(
            (1, self._N_pad), jnp.float32).at[0, :out_features].set(b)

    # ---- tile selection -------------------------------------------------------
    def _choose_tiles(self, M, dtype):
        # dtype-aware minimum second-to-last-dim tiling (f32:8, bf16:16, int8:32)
        min_tm = max(8, 32 // jnp.dtype(dtype).itemsize)
        if M >= MAX_TILE:
            TM = MAX_TILE
        elif M >= 128:
            TM = 128
        else:
            TM = _pad_to(max(M, 1), min_tm)
        TN = MAX_TILE if self._N_pad % MAX_TILE == 0 else HASH_BLOCK_N
        M_pad = _pad_to(max(M, 1), TM)
        # Keep >= 2 parallel output tiles so both v7x TensorCores get work.
        if (M_pad // TM) * (self._N_pad // TN) < 2:
            if TN > HASH_BLOCK_N and self._N_pad // HASH_BLOCK_N >= 2:
                TN = HASH_BLOCK_N
            elif TM > 128 and M_pad // 128 >= 2:
                TM = 128
        return TM, TN, M_pad

    # ---- forward --------------------------------------------------------------
    def __call__(self, x):
        original_shape = x.shape
        x2d = x.reshape(-1, original_shape[-1])           # preprocess
        M = x2d.shape[0]
        TM, TN, M_pad = self._choose_tiles(M, x2d.dtype)

        # Only materialize a padded copy of x when actually required.
        if M_pad != M or self._K_pad != self.in_features:
            x_in = jnp.zeros((M_pad, self._K_pad), x2d.dtype)
            x_in = x_in.at[:M, :self.in_features].set(x2d)
        else:
            x_in = x2d

        y = ssl_linear_pallas(
            x_in, self._weight_pad_t, self._bias_pad2d, self.idx_flat,
            tm=TM, tn=TN, tk=BLOCK_K_SIZE_MIN,
            u_steps=self.u_steps, num_k_blocks=self.num_k_blocks)

        if M_pad != M or self._N_pad != self.out_features:
            y = y[:M, :self.out_features]
        return y.reshape(*original_shape[:-1], self.out_features)  # postprocess

    # ---- pure reference (builds the virtual full weight explicitly) -----------
    def reference(self, x):
        original_shape = x.shape
        x2d = np.asarray(x).reshape(-1, original_shape[-1]).astype(np.float32)
        tk, tnh = BLOCK_K_SIZE_MIN, HASH_BLOCK_N
        W_full = np.zeros((self._N_pad, self._K_pad), np.float32)
        w_np = np.asarray(self._weight_pad)
        idx = np.asarray(self.idx_flat).reshape(
            self._N_pad // tnh, self.num_k_blocks)
        for nb in range(self._N_pad // tnh):
            for kb in range(self.num_k_blocks):
                r = int(idx[nb, kb])
                W_full[nb * tnh:(nb + 1) * tnh, kb * tk:(kb + 1) * tk] = \
                    w_np[nb * tnh:(nb + 1) * tnh, r * tk:(r + 1) * tk]
        W_full = W_full[:self.out_features, :self.in_features]
        y = x2d @ W_full.T
        if self.bias is not None:
            y = y + np.asarray(self.bias)
        return y.reshape(*original_shape[:-1], self.out_features)


# --------------------------------------------------------------------- main --
if __name__ == "__main__":
    key = jax.random.PRNGKey(0)
    k_params, k_params2, k_x1, k_x2, k_x3 = jax.random.split(key, 5)

    # Model 1: 512 -> 256, redn 2.
    model = SSLPallas(512, 256, bias=True, redn_factor=2, seed=1024, key=k_params)

    # Small 3-D input (batch=2, seq=4, hidden=512) -> flattened M = 8 rows
    # (tiny-batch TM path, TN=128 so both cores still get a tile).
    x_small = jax.random.normal(k_x1, (2, 4, 512), dtype=jnp.float32)
    y_small = jax.block_until_ready(model(x_small))
    assert y_small.shape == (2, 4, 256)
    np.testing.assert_allclose(np.asarray(y_small), model.reference(x_small),
                               rtol=5e-4, atol=5e-4)

    # 2-D batch (M=256): aligned zero-copy path, U=4 unrolled reduction.
    x_big = jax.random.normal(k_x2, (256, 512), dtype=jnp.float32)
    y_big = jax.block_until_ready(model(x_big))
    np.testing.assert_allclose(np.asarray(y_big), model.reference(x_big),
                               rtol=5e-4, atol=5e-4)

    # Model 2: 512 -> 512 exercising the 256x256 tile path (V=2 hash sub-blocks
    # per output tile, 2x2 parallel output tiles).
    model2 = SSLPallas(512, 512, bias=True, redn_factor=2, seed=7, key=k_params2)
    x_wide = jax.random.normal(k_x3, (512, 512), dtype=jnp.float32)
    y_wide = jax.block_until_ready(model2(x_wide))
    np.testing.assert_allclose(np.asarray(y_wide), model2.reference(x_wide),
                               rtol=5e-4, atol=5e-4)

    print("KERNEL_OK")
</pallas_src>

<mosaic_0001>
module attributes {stable_mosaic.version = 11 : i64} {
  func.func @_ssl_matmul_kernel(%arg0: i32, %arg1: i32, %arg2: i32, %arg3: memref<8xi32, #tpu.memory_space<smem>>, %arg4: memref<8x512xf32, #tpu.memory_space<vmem>>, %arg5: memref<256x128xf32, #tpu.memory_space<vmem>>, %arg6: memref<1x128xf32, #tpu.memory_space<vmem>>, %arg7: memref<8x128xf32, #tpu.memory_space<vmem>>, %arg8: memref<8x128xf32, #tpu.memory_space<vmem>>) attributes {dimension_semantics = [#tpu.dimension_semantics<parallel>, #tpu.dimension_semantics<parallel>, #tpu.dimension_semantics<arbitrary>], iteration_bounds = array<i64: 2, 1, 1>, scalar_prefetch = 1 : i64, scratch_operands = 1 : i64, tpu.core_type = #tpu.core_type<tc>, window_params = [{transform_indices = @transform_0, window_bounds = array<i64: 8, 512>}, {transform_indices = @transform_1, window_bounds = array<i64: 256, 128>}, {transform_indices = @transform_2, window_bounds = array<i64: 1, 128>}, {transform_indices = @transform_3, window_bounds = array<i64: 8, 128>}]} {
    %c0_i32 = arith.constant 0 : i32
    %0 = arith.cmpi eq, %arg2, %c0_i32 : i32
    %1 = arith.extui %0 : i1 to i32
    %c0_i32_0 = arith.constant 0 : i32
    %2 = arith.cmpi ne, %1, %c0_i32_0 : i32
    scf.if %2 {
      %c0_49 = arith.constant 0 : index
      %c0_50 = arith.constant 0 : index
      %74 = vector.load %arg6[%c0_49, %c0_50] : memref<1x128xf32, #tpu.memory_space<vmem>>, vector<1x128xf32>
      %75 = vector.shape_cast %74 : vector<1x128xf32> to vector<1x128xf32>
      %76 = vector.broadcast %75 : vector<1x128xf32> to vector<8x128xf32>
      %c0_51 = arith.constant 0 : index
      %c0_52 = arith.constant 0 : index
      %77 = vector.load %arg8[%c0_51, %c0_52] : memref<8x128xf32, #tpu.memory_space<vmem>>, vector<8x128xf32>
      tpu.vector_store %arg8[%c0_51, %c0_52], %76 {strides = array<i32>} : memref<8x128xf32, #tpu.memory_space<vmem>>, vector<8x128xf32>,
    } else {
    }
    %c0 = arith.constant 0 : index
    %c0_1 = arith.constant 0 : index
    %3 = vector.load %arg4[%c0, %c0_1] : memref<8x512xf32, #tpu.memory_space<vmem>>, vector<8x128xf32>
    %c1_i32 = arith.constant 1 : i32
    %4 = arith.muli %arg0, %c1_i32 : i32
    %c0_i32_2 = arith.constant 0 : i32
    %5 = arith.addi %4, %c0_i32_2 : i32
    %c4_i32 = arith.constant 4 : i32
    %6 = arith.muli %5, %c4_i32 : i32
    %c4_i32_3 = arith.constant 4 : i32
    %7 = arith.muli %arg2, %c4_i32_3 : i32
    %8 = arith.addi %6, %7 : i32
    %c0_i32_4 = arith.constant 0 : i32
    %9 = arith.addi %8, %c0_i32_4 : i32
    %10 = arith.index_cast %9 : i32 to index
    %11 = memref.load %arg3[%10] : memref<8xi32, #tpu.memory_space<smem>>
    %c128_i32 = arith.constant 128 : i32
    %12 = arith.muli %11, %c128_i32 : i32
    %13 = tpu.assume_multiple %12, 128 : i32
    %14 = arith.index_cast %13 : i32 to index
    %c0_5 = arith.constant 0 : index
    %15 = vector.load %arg5[%14, %c0_5] : memref<256x128xf32, #tpu.memory_space<vmem>>, vector<128x128xf32>
    %c0_6 = arith.constant 0 : index
    %c0_7 = arith.constant 0 : index
    %16 = vector.load %arg8[%c0_6, %c0_7] : memref<8x128xf32, #tpu.memory_space<vmem>>, vector<8x128xf32>
    %cst = arith.constant dense<0.000000e+00> : vector<8x128xf32>
    %17 = tpu.matmul %3, %15, %cst {dimension_numbers = #tpu.dot_dimension_numbers<[1], [0], [0], [1], [0, 0, 1, 1], [], []>} : vector<8x128xf32>, vector<128x128xf32>, vector<8x128xf32> -> vector<8x128xf32>
    %18 = arith.addf %16, %17 : vector<8x128xf32>
    %c0_8 = arith.constant 0 : index
    %c0_9 = arith.constant 0 : index
    %19 = vector.load %arg8[%c0_8, %c0_9] : memref<8x128xf32, #tpu.memory_space<vmem>>, vector<8x128xf32>
    tpu.vector_store %arg8[%c0_8, %c0_9], %18 {strides = array<i32>} : memref<8x128xf32, #tpu.memory_space<vmem>>, vector<8x128xf32>,
    %c0_10 = arith.constant 0 : index
    %c128 = arith.constant 128 : index
    %20 = vector.load %arg4[%c0_10, %c128] : memref<8x512xf32, #tpu.memory_space<vmem>>, vector<8x128xf32>
    %c1_i32_11 = arith.constant 1 : i32
    %21 = arith.muli %arg0, %c1_i32_11 : i32
    %c0_i32_12 = arith.constant 0 : i32
    %22 = arith.addi %21, %c0_i32_12 : i32
    %c4_i32_13 = arith.constant 4 : i32
    %23 = arith.muli %22, %c4_i32_13 : i32
    %c4_i32_14 = arith.constant 4 : i32
    %24 = arith.muli %arg2, %c4_i32_14 : i32
    %25 = arith.addi %23, %24 : i32
    %c1_i32_15 = arith.constant 1 : i32
    %26 = arith.addi %25, %c1_i32_15 : i32
    %27 = arith.index_cast %26 : i32 to index
    %28 = memref.load %arg3[%27] : memref<8xi32, #tpu.memory_space<smem>>
    %c128_i32_16 = arith.constant 128 : i32
    %29 = arith.muli %28, %c128_i32_16 : i32
    %30 = tpu.assume_multiple %29, 128 : i32
    %31 = arith.index_cast %30 : i32 to index
    %c0_17 = arith.constant 0 : index
    %32 = vector.load %arg5[%31, %c0_17] : memref<256x128xf32, #tpu.memory_space<vmem>>, vector<128x128xf32>
    %c0_18 = arith.constant 0 : index
    %c0_19 = arith.constant 0 : index
    %33 = vector.load %arg8[%c0_18, %c0_19] : memref<8x128xf32, #tpu.memory_space<vmem>>, vector<8x128xf32>
    %cst_20 = arith.constant dense<0.000000e+00> : vector<8x128xf32>
    %34 = tpu.matmul %20, %32, %cst_20 {dimension_numbers = #tpu.dot_dimension_numbers<[1], [0], [0], [1], [0, 0, 1, 1], [], []>} : vector<8x128xf32>, vector<128x128xf32>, vector<8x128xf32> -> vector<8x128xf32>
    %35 = arith.addf %33, %34 : vector<8x128xf32>
    %c0_21 = arith.constant 0 : index
    %c0_22 = arith.constant 0 : index
    %36 = vector.load %arg8[%c0_21, %c0_22] : memref<8x128xf32, #tpu.memory_space<vmem>>, vector<8x128xf32>
    tpu.vector_store %arg8[%c0_21, %c0_22], %35 {strides = array<i32>} : memref<8x128xf32, #tpu.memory_space<vmem>>, vector<8x128xf32>,
    %c0_23 = arith.constant 0 : index
    %c256 = arith.constant 256 : index
    %37 = vector.load %arg4[%c0_23, %c256] : memref<8x512xf32, #tpu.memory_space<vmem>>, vector<8x128xf32>
    %c1_i32_24 = arith.constant 1 : i32
    %38 = arith.muli %arg0, %c1_i32_24 : i32
    %c0_i32_25 = arith.constant 0 : i32
    %39 = arith.addi %38, %c0_i32_25 : i32
    %c4_i32_26 = arith.constant 4 : i32
    %40 = arith.muli %39, %c4_i32_26 : i32
    %c4_i32_27 = arith.constant 4 : i32
    %41 = arith.muli %arg2, %c4_i32_27 : i32
    %42 = arith.addi %40, %41 : i32
    %c2_i32 = arith.constant 2 : i32
    %43 = arith.addi %42, %c2_i32 : i32
    %44 = arith.index_cast %43 : i32 to index
    %45 = memref.load %arg3[%44] : memref<8xi32, #tpu.memory_space<smem>>
    %c128_i32_28 = arith.constant 128 : i32
    %46 = arith.muli %45, %c128_i32_28 : i32
    %47 = tpu.assume_multiple %46, 128 : i32
    %48 = arith.index_cast %47 : i32 to index
    %c0_29 = arith.constant 0 : index
    %49 = vector.load %arg5[%48, %c0_29] : memref<256x128xf32, #tpu.memory_space<vmem>>, vector<128x128xf32>
    %c0_30 = arith.constant 0 : index
    %c0_31 = arith.constant 0 : index
    %50 = vector.load %arg8[%c0_30, %c0_31] : memref<8x128xf32, #tpu.memory_space<vmem>>, vector<8x128xf32>
    %cst_32 = arith.constant dense<0.000000e+00> : vector<8x128xf32>
    %51 = tpu.matmul %37, %49, %cst_32 {dimension_numbers = #tpu.dot_dimension_numbers<[1], [0], [0], [1], [0, 0, 1, 1], [], []>} : vector<8x128xf32>, vector<128x128xf32>, vector<8x128xf32> -> vector<8x128xf32>
    %52 = arith.addf %50, %51 : vector<8x128xf32>
    %c0_33 = arith.constant 0 : index
    %c0_34 = arith.constant 0 : index
    %53 = vector.load %arg8[%c0_33, %c0_34] : memref<8x128xf32, #tpu.memory_space<vmem>>, vector<8x128xf32>
    tpu.vector_store %arg8[%c0_33, %c0_34], %52 {strides = array<i32>} : memref<8x128xf32, #tpu.memory_space<vmem>>, vector<8x128xf32>,
    %c0_35 = arith.constant 0 : index
    %c384 = arith.constant 384 : index
    %54 = vector.load %arg4[%c0_35, %c384] : memref<8x512xf32, #tpu.memory_space<vmem>>, vector<8x128xf32>
    %c1_i32_36 = arith.constant 1 : i32
    %55 = arith.muli %arg0, %c1_i32_36 : i32
    %c0_i32_37 = arith.constant 0 : i32
    %56 = arith.addi %55, %c0_i32_37 : i32
    %c4_i32_38 = arith.constant 4 : i32
    %57 = arith.muli %56, %c4_i32_38 : i32
    %c4_i32_39 = arith.constant 4 : i32
    %58 = arith.muli %arg2, %c4_i32_39 : i32
    %59 = arith.addi %57, %58 : i32
    %c3_i32 = arith.constant 3 : i32
    %60 = arith.addi %59, %c3_i32 : i32
    %61 = arith.index_cast %60 : i32 to index
    %62 = memref.load %arg3[%61] : memref<8xi32, #tpu.memory_space<smem>>
    %c128_i32_40 = arith.constant 128 : i32
    %63 = arith.muli %62, %c128_i32_40 : i32
    %64 = tpu.assume_multiple %63, 128 : i32
    %65 = arith.index_cast %64 : i32 to index
    %c0_41 = arith.constant 0 : index
    %66 = vector.load %arg5[%65, %c0_41] : memref<256x128xf32, #tpu.memory_space<vmem>>, vector<128x128xf32>
    %c0_42 = arith.constant 0 : index
    %c0_43 = arith.constant 0 : index
    %67 = vector.load %arg8[%c0_42, %c0_43] : memref<8x128xf32, #tpu.memory_space<vmem>>, vector<8x128xf32>
    %cst_44 = arith.constant dense<0.000000e+00> : vector<8x128xf32>
    %68 = tpu.matmul %54, %66, %cst_44 {dimension_numbers = #tpu.dot_dimension_numbers<[1], [0], [0], [1], [0, 0, 1, 1], [], []>} : vector<8x128xf32>, vector<128x128xf32>, vector<8x128xf32> -> vector<8x128xf32>
    %69 = arith.addf %67, %68 : vector<8x128xf32>
    %c0_45 = arith.constant 0 : index
    %c0_46 = arith.constant 0 : index
    %70 = vector.load %arg8[%c0_45, %c0_46] : memref<8x128xf32, #tpu.memory_space<vmem>>, vector<8x128xf32>
    tpu.vector_store %arg8[%c0_45, %c0_46], %69 {strides = array<i32>} : memref<8x128xf32, #tpu.memory_space<vmem>>, vector<8x128xf32>,
    %c0_i32_47 = arith.constant 0 : i32
    %71 = arith.cmpi eq, %arg2, %c0_i32_47 : i32
    %72 = arith.extui %71 : i1 to i32
    %c0_i32_48 = arith.constant 0 : i32
    %73 = arith.cmpi ne, %72, %c0_i32_48 : i32
    scf.if %73 {
      %c0_49 = arith.constant 0 : index
      %c0_50 = arith.constant 0 : index
      %74 = vector.load %arg8[%c0_49, %c0_50] : memref<8x128xf32, #tpu.memory_space<vmem>>, vector<8x128xf32>
      %c0_51 = arith.constant 0 : index
      %c0_52 = arith.constant 0 : index
      %75 = vector.load %arg7[%c0_51, %c0_52] : memref<8x128xf32, #tpu.memory_space<vmem>>, vector<8x128xf32>
      tpu.vector_store %arg7[%c0_51, %c0_52], %74 {strides = array<i32>} : memref<8x128xf32, #tpu.memory_space<vmem>>, vector<8x128xf32>,
    } else {
    }
    return
  }
  func.func @transform_0(%arg0: i32, %arg1: i32, %arg2: i32, %arg3: memref<8xi32, #tpu.memory_space<smem>>) -> (i32, i32) {
    %c0_i32 = arith.constant 0 : i32
    return %arg1, %arg2 : i32, i32
  }
  func.func @transform_1(%arg0: i32, %arg1: i32, %arg2: i32, %arg3: memref<8xi32, #tpu.memory_space<smem>>) -> (i32, i32) {
    %c0_i32 = arith.constant 0 : i32
    %c0_i32_0 = arith.constant 0 : i32
    return %c0_i32, %arg0 : i32, i32
  }
  func.func @transform_2(%arg0: i32, %arg1: i32, %arg2: i32, %arg3: memref<8xi32, #tpu.memory_space<smem>>) -> (i32, i32) {
    %c0_i32 = arith.constant 0 : i32
    %c0_i32_0 = arith.constant 0 : i32
    return %c0_i32, %arg0 : i32, i32
  }
  func.func @transform_3(%arg0: i32, %arg1: i32, %arg2: i32, %arg3: memref<8xi32, #tpu.memory_space<smem>>) -> (i32, i32) {
    %c0_i32 = arith.constant 0 : i32
    return %arg1, %arg0 : i32, i32
  }
}

</mosaic_0001>

<llo_original>
// kernel: tpu_custom_call.1
$region0: #{tpu_custom_call.1}
  #allocation0 [shape = 'u32[]', space=smem, size = 0x4, offset = 0x4, fixed_abs, tag = 'smem constant byte address 0x4 - core index']
  #allocation1 [shape = 'u32[144,128]{1,0:T(1,128)}', space=vmem, size = 0x12000, scoped, tag = 'internal scratch']
  #allocation2 [shape = 'f32[8,128]{1,0:T(8,128)}', space=vmem, size = 0x1000, scoped, tag = 'scratch operand']
  #allocation3 [shape = 's32[1]{0}', space=sflag, size = 0x4, scoped, tag = 'scoped memory for tpu_custom_call.1']
  #allocation4 [shape = 'u8[512]{0}', space=smem, size = 0x200, scoped, tag = 'prefetched SMEM operand 0']
  %s0 = inlined_call_operand.hbm [shape: s32[8], index: 0, kind: input, shape index: {}]
  %s1 = inlined_call_operand.hbm [shape: f32[8,512], index: 1, kind: input, shape index: {}]
  %s2 = inlined_call_operand.hbm [shape: f32[256,256], index: 2, kind: input, shape index: {}]
  %s3 = inlined_call_operand.vmem [shape: f32[1,256], index: 3, kind: input, shape index: {}]
  %s4 = inlined_call_operand.hbm [shape: f32[8,256], index: 4, kind: output, shape index: {}]
  %s5 = sld [smem:[#allocation0]]
  $region61: #{tpu_custom_call.1} parent=0
    _
  %s7 = ssub.s32 1, %s5
  %s8 = scalar_select 0, %s7, %s5
  %10 = dma.hbm_to_smem %s0, 16, [#allocation4], [#allocation3]
  %11 = dma.done [#allocation3], 16
  %12 = sfence
  $region1: #{tpu_custom_call.1} parent=0
    #allocation5 [shape = 'u8[16384]{0}', space=vmem, size = 0x4000, scoped, tag = 'input window, operand 1, single buffered']
    #allocation6 [shape = 's32[2]{0}', space=sflag, size = 0x8, scoped, tag = 'scoped memory for tpu_custom_call.1']
    #allocation7 [shape = 's32[2]{0}', space=sflag, size = 0x8, scoped, tag = 'scoped memory for tpu_custom_call.1']
    #allocation8 [shape = 'u8[262144]{0}', space=vmem, size = 0x40000, scoped, tag = 'input window, operand 2']
    #allocation9 [shape = 's32[2]{0}', space=sflag, size = 0x8, scoped, tag = 'scoped memory for tpu_custom_call.1']
    #allocation10 [shape = 'u8[8192]{0}', space=vmem, size = 0x2000, scoped, tag = 'output window, operand 0']
    %13 = vsyncpa [#allocation6], 0
    %14 = vsyncpa [#allocation9], 0
    %s15 = scalar_lea.sflag [#allocation9], 1
    %16 = vsyncpa %s15, 0
    %17 = vsyncpa [#allocation7], 0
    %s18 = scalar_lea.sflag [#allocation7], 1
    %19 = vsyncpa %s18, 0
    loop: start=0, step=1, limit=4
    $region2: #{tpu_custom_call.1} parent=1 // loop_pre_header
      _
    $region3: #{tpu_custom_call.1} parent=1 // loop_header
      %s21 = sphi 0, %s25
      %p22 = scmp.ge.s32.totalorder %s21, 4
      %s28 = sphi 0, %s47
      %s29 = sphi 0, %s43
      %s30 = sphi 0, %s39
      %s31 = sphi 0, %s28
      %s32 = sphi 0, %s29
      %s33 = sphi 0, %s30
      %s34 = sphi 0, %s31
      %s35 = sphi 0, %s32
      %s36 = sphi 0, %s33
      %s52 = sphi 0, %s54
      %s55 = sphi 0, %s52
      %s56 = sphi 0, %s55
      %s72 = sphi 0, %s56
      %s78 = sphi 0, %s80
      %s81 = sphi 0, %s78
      %s82 = sphi 0, %s81
      %s98 = sphi 0, %s82
      %s104 = sphi 0, %s106
      %s107 = sphi 0, %s104
      %s108 = sphi 0, %s107
      %s124 = sphi 0, %s108
      %s132 = sphi 0, %s134
      %s135 = sphi 0, %s132
      %s136 = sphi 0, %s135
      %s152 = sphi 0, %s136
    $region4: #{tpu_custom_call.1} parent=1 // loop_header_branch
      %24 = sbr.rel (%p22) target = $region8
    $region5: #{tpu_custom_call.1} parent=1 // loop_body
      %s26 = ssub.s32 %s21, 1
      %s27 = ssub.s32 %s21, 2
      %s37 = sadd.s32 1, %s30
      %p38 = scmp.ge.s32.totalorder %s37, 1
      %s39 = scalar_select %p38, 0, %s37
      %s40 = sadd.s32 1, %s29
      %s41 = scalar_select %p38, %s40, %s29
      %p42 = scmp.ge.s32.totalorder %s41, 1
      %s43 = scalar_select %p42, 0, %s41
      %s44 = sadd.s32 1, %s28
      %s45 = scalar_select %p42, %s44, %s28
      %p46 = scmp.ge.s32.totalorder %s45, 2
      %s47 = scalar_select %p46, 0, %s45
      %s48 = ssub.s32 %s29, %s43
      %s49 = ssub.s32 %s30, %s39
      %s50 = sor.u32 %s48, %s49
      %p51 = scmp.eq.s32.totalorder %s50, 0
      %s53 = sadd.s32 %s52, 1
      %s54 = scalar_select %p51, %s52, %s53
      %p57 = pneg %p51
      %p58 = scmp.eq.s32.totalorder %s21, 1
      %p59 = por %p57, %p58
      %p60 = scmp.ne.s32.totalorder %s52, %s55
      %p61 = scmp.eq.s32.totalorder %s21, 0
      %p62 = por %p60, %p61
      %p63 = scmp.ne.s32.totalorder %s52, %s55
      %p64 = scmp.eq.s32.totalorder %s26, 1
      %p65 = por %p63, %p64
      %p66 = scmp.ne.s32.totalorder %s55, %s56
      %p67 = scmp.eq.s32.totalorder %s26, 0
      %p68 = por %p66, %p67
      %p69 = scmp.ne.s32.totalorder %s55, %s56
      %p70 = scmp.eq.s32.totalorder %s27, 1
      %p71 = por %p69, %p70
      %p73 = scmp.ne.s32.totalorder %s56, %s72
      %p74 = scmp.eq.s32.totalorder %s27, 0
      %p75 = por %p73, %p74
      %s76 = ssub.s32 %s28, %s47
      %p77 = scmp.eq.s32.totalorder %s76, 0
      %s79 = sadd.s32 %s78, 1
      %s80 = scalar_select %p77, %s78, %s79
      %p83 = pneg %p77
      %p84 = scmp.eq.s32.totalorder %s21, 1
      %p85 = por %p83, %p84
      %p86 = scmp.ne.s32.totalorder %s78, %s81
      %p87 = scmp.eq.s32.totalorder %s21, 0
      %p88 = por %p86, %p87
      %p89 = scmp.ne.s32.totalorder %s78, %s81
      %p90 = scmp.eq.s32.totalorder %s26, 1
      %p91 = por %p89, %p90
      %p92 = scmp.ne.s32.totalorder %s81, %s82
      %p93 = scmp.eq.s32.totalorder %s26, 0
      %p94 = por %p92, %p93
      %p95 = scmp.ne.s32.totalorder %s81, %s82
      %p96 = scmp.eq.s32.totalorder %s27, 1
      %p97 = por %p95, %p96
      %p99 = scmp.ne.s32.totalorder %s82, %s98
      %p100 = scmp.eq.s32.totalorder %s27, 0
      %p101 = por %p99, %p100
      %s102 = ssub.s32 %s28, %s47
      %p103 = scmp.eq.s32.totalorder %s102, 0
      %s105 = sadd.s32 %s104, 1
      %s106 = scalar_select %p103, %s104, %s105
      %p109 = pneg %p103
      %p110 = scmp.eq.s32.totalorder %s21, 1
      %p111 = por %p109, %p110
      %p112 = scmp.ne.s32.totalorder %s104, %s107
      %p113 = scmp.eq.s32.totalorder %s21, 0
      %p114 = por %p112, %p113
      %p115 = scmp.ne.s32.totalorder %s104, %s107
      %p116 = scmp.eq.s32.totalorder %s26, 1
      %p117 = por %p115, %p116
      %p118 = scmp.ne.s32.totalorder %s107, %s108
      %p119 = scmp.eq.s32.totalorder %s26, 0
      %p120 = por %p118, %p119
      %p121 = scmp.ne.s32.totalorder %s107, %s108
      %p122 = scmp.eq.s32.totalorder %s27, 1
      %p123 = por %p121, %p122
      %p125 = scmp.ne.s32.totalorder %s108, %s124
      %p126 = scmp.eq.s32.totalorder %s27, 0
      %p127 = por %p125, %p126
      %s128 = ssub.s32 %s29, %s43
      %s129 = ssub.s32 %s28, %s47
      %s130 = sor.u32 %s128, %s129
      %p131 = scmp.eq.s32.totalorder %s130, 0
      %s133 = sadd.s32 %s132, 1
      %s134 = scalar_select %p131, %s132, %s133
      %p137 = pneg %p131
      %p138 = scmp.eq.s32.totalorder %s21, 1
      %p139 = por %p137, %p138
      %p140 = scmp.ne.s32.totalorder %s132, %s135
      %p141 = scmp.eq.s32.totalorder %s21, 0
      %p142 = por %p140, %p141
      %p143 = scmp.ne.s32.totalorder %s132, %s135
      %p144 = scmp.eq.s32.totalorder %s26, 1
      %p145 = por %p143, %p144
      %p146 = scmp.ne.s32.totalorder %s135, %s136
      %p147 = scmp.eq.s32.totalorder %s26, 0
      %p148 = por %p146, %p147
      %p149 = scmp.ne.s32.totalorder %s135, %s136
      %p150 = scmp.eq.s32.totalorder %s27, 1
      %p151 = por %p149, %p150
      %p153 = scmp.ne.s32.totalorder %s136, %s152
      %p154 = scmp.eq.s32.totalorder %s27, 0
      %p155 = por %p153, %p154
      %p156 = scmp.le.s32.totalorder 1, %s21
      %p157 = scmp.lt.s32.totalorder %s21, 3
      %p158 = pnand %p156, %p157
      %p159 = pneg %p158
      // Predicated region
      $region9: #{tpu_custom_call.1} parent=5 // pred_check
        _
      $region10: #{tpu_custom_call.1} parent=5 // pred_check_branch
        %161 = sbr.rel (%p158) target = $region12
      $region11: #{tpu_custom_call.1} parent=5 // pred_region
        %s162 = ssub.s32 %s21, 1
        // Predicated region
        $region13: #{tpu_custom_call.1} parent=11 // pred_check
          %p163 = pneg %p68
        $region14: #{tpu_custom_call.1} parent=11 // pred_check_branch
          %165 = sbr.rel (%p163) target = $region16
        $region15: #{tpu_custom_call.1} parent=11 // pred_region
          %s166 = smul.u32 4, %s33
          %s168 = ssub.s32 512, 512
          %169 = vsyncadd [#allocation6], %s168
          %s170 = smul.addr %s32, 4
          %s171 = sadd.s32 %s166, %s170
          %s172 = smul.addr %s171, 128
          %s173 = scalar_lea.hbm %s1, %s172
          %s175 = sshll.u32 [#allocation5], 4
          %s176 = int_to_ptr.vmem [resolvable:$true] %s175
          %178 = dma.hbm_to_vmem [thread:$0]  %s173, 512, %s176, [#allocation6]
        $region16: #{tpu_custom_call.1} parent=11 // pred_fallthru
          _
      $region12: #{tpu_custom_call.1} parent=5 // pred_fallthru
        _
      %p179 = scmp.lt.s32.totalorder %s21, 2
      // Predicated region
      $region17: #{tpu_custom_call.1} parent=5 // pred_check
        %p180 = pneg %p179
      $region18: #{tpu_custom_call.1} parent=5 // pred_check_branch
        %182 = sbr.rel (%p180) target = $region20
      $region19: #{tpu_custom_call.1} parent=5 // pred_region
        // Predicated region
        $region21: #{tpu_custom_call.1} parent=19 // pred_check
          %p183 = pneg %p88
        $region22: #{tpu_custom_call.1} parent=19 // pred_check_branch
          %185 = sbr.rel (%p183) target = $region24
        $region23: #{tpu_custom_call.1} parent=19 // pred_region
          %s186 = sand.u32 %s78, 1
          %s187 = scalar_lea.sflag [#allocation9], %s186
          %s188 = sand.u32 %s78, 1
          %s189 = smul.addr %s188, 256
          %s190 = scalar_lea.vmem [#allocation8], %s189
          %s192 = ssub.s32 4096, 4096
          %193 = vsyncadd %s187, %s192
          %s194 = smul.addr %s28, 128
          %s195 = scalar_lea.hbm %s2, %s194
          %s196 = sshll.u32 %s190, 4
          %s197 = int_to_ptr.vmem [resolvable:$true] %s196
          %202 = dma.hbm_to_vmem [thread:$0]  %s195, 4096, %s197, %s187, 256, 128, 8
        $region24: #{tpu_custom_call.1} parent=19 // pred_fallthru
          _
        // Predicated region
        $region25: #{tpu_custom_call.1} parent=19 // pred_check
          %p203 = pneg %p114
        $region26: #{tpu_custom_call.1} parent=19 // pred_check_branch
          %205 = sbr.rel (%p203) target = $region28
        $region27: #{tpu_custom_call.1} parent=19 // pred_region
          %p206 = scmp.lt.s32.totalorder %s28, 1
          %s207 = scalar_select %p206, %s28, 1
          %s208 = scalar_lea.vmem %s3, %s207
        $region28: #{tpu_custom_call.1} parent=19 // pred_fallthru
          _
      $region20: #{tpu_custom_call.1} parent=5 // pred_fallthru
        _
      %p209 = scmp.le.s32.totalorder 1, %s21
      %p210 = scmp.lt.s32.totalorder %s21, 3
      %p211 = pnand %p209, %p210
      %p212 = pneg %p211
      // Predicated region
      $region29: #{tpu_custom_call.1} parent=5 // pred_check
        _
      $region30: #{tpu_custom_call.1} parent=5 // pred_check_branch
        %214 = sbr.rel (%p211) target = $region32
      $region31: #{tpu_custom_call.1} parent=5 // pred_region
        %s215 = ssub.s32 %s21, 1
        // Predicated region
        $region33: #{tpu_custom_call.1} parent=31 // pred_check
          %p216 = pneg %p68
        $region34: #{tpu_custom_call.1} parent=31 // pred_check_branch
          %218 = sbr.rel (%p216) target = $region36
        $region35: #{tpu_custom_call.1} parent=31 // pred_region
          %219 = dma.done [#allocation6], 512
        $region36: #{tpu_custom_call.1} parent=31 // pred_fallthru
          _
        %s220 = sand.u32 %s81, 1
        %s221 = scalar_lea.sflag [#allocation9], %s220
        %s222 = sand.u32 %s81, 1
        %s223 = smul.addr %s222, 256
        %s224 = scalar_lea.vmem [#allocation8], %s223
        // Predicated region
        $region37: #{tpu_custom_call.1} parent=31 // pred_check
          %p225 = pneg %p94
        $region38: #{tpu_custom_call.1} parent=31 // pred_check_branch
          %227 = sbr.rel (%p225) target = $region40
        $region39: #{tpu_custom_call.1} parent=31 // pred_region
          %228 = dma.done %s221, 4096
        $region40: #{tpu_custom_call.1} parent=31 // pred_fallthru
          _
        %p229 = pneg %p68
        %p230 = pneg %p65
        %s231 = sand.u32 %s81, 1
        %s232 = scalar_lea.sflag [#allocation9], %s231
        %s233 = sand.u32 %s81, 1
        %s234 = smul.addr %s233, 256
        %s235 = scalar_lea.vmem [#allocation8], %s234
        %p236 = pneg %p94
        %p237 = pneg %p91
        %p238 = scmp.lt.s32.totalorder %s31, 1
        %s239 = scalar_select %p238, %s31, 1
        %s240 = scalar_lea.vmem %s3, %s239
        %p241 = pneg %p120
        %p242 = pneg %p117
        %p243 = pneg %p148
        %p244 = pneg %p145
        %s245 = sand.u32 %s135, 1
        %s246 = scalar_lea.sflag [#allocation7], %s245
        %s247 = sand.u32 %s135, 1
        %s248 = smul.addr %s247, 8
        %s249 = scalar_lea.vmem [#allocation10], %s248
        %s250 = smul.u32 4, %s33
        %p251 = scmp.lt.s32.totalorder %s31, 1
        %s252 = scalar_select %p251, %s31, 1
        %s253 = scalar_lea.vmem %s3, %s252
        %p254 = scmp.eq.s32.totalorder %s33, 0
        // Predicated region
        $region41: #{tpu_custom_call.1} parent=31 // pred_check
          %p255 = pneg %p254
        $region42: #{tpu_custom_call.1} parent=31 // pred_check_branch
          %257 = sbr.rel (%p255) target = $region44
        $region43: #{tpu_custom_call.1} parent=31 // pred_region
          %v258 = vld [vmem:[%s253] sm:$0x1]
          %v260 = vlaneseq
          %v261 = vshrl.u32 %v260, 7
          %v262 = vsub.s32 0, %v261
          %v263 = vrot.slane %v258, %v262
          %265 = vst [vmem:[#allocation2] sm:$0xff] %v263
        $region44: #{tpu_custom_call.1} parent=31 // pred_fallthru
          _
        %v266 = vld [vmem:[#allocation5] sm:$0xff]
        %s267 = smul.u32 %s31, 4
        %s268 = smul.u32 %s33, 4
        %s269 = sadd.s32 %s267, %s268
        %s270 = sld [smem:[#allocation4 + %s269]]
        %s271 = smul.u32 %s270, 128
        %s272 = scalar_lea.vmem %s224, %s271 [#allocation8]
        %v273 = vld [vmem:[%s272] sm:$0xff]
        %v274 = vld [vmem:[%s272 + $0x8] sm:$0xff]
        %v275 = vld [vmem:[%s272 + $0x10] sm:$0xff]
        %v276 = vld [vmem:[%s272 + $0x18] sm:$0xff]
        %v277 = vld [vmem:[%s272 + $0x20] sm:$0xff]
        %v278 = vld [vmem:[%s272 + $0x28] sm:$0xff]
        %v279 = vld [vmem:[%s272 + $0x30] sm:$0xff]
        %v280 = vld [vmem:[%s272 + $0x38] sm:$0xff]
        %v281 = vld [vmem:[%s272 + $0x40] sm:$0xff]
        %v282 = vld [vmem:[%s272 + $0x48] sm:$0xff]
        %v283 = vld [vmem:[%s272 + $0x50] sm:$0xff]
        %v284 = vld [vmem:[%s272 + $0x58] sm:$0xff]
        %v285 = vld [vmem:[%s272 + $0x60] sm:$0xff]
        %v286 = vld [vmem:[%s272 + $0x68] sm:$0xff]
        %v287 = vld [vmem:[%s272 + $0x70] sm:$0xff]
        %v288 = vld [vmem:[%s272 + $0x78] sm:$0xff]
        %v289 = vld [vmem:[#allocation2] sm:$0xff]
        %290 = vmatprep.subr.mxu0 0.0
        %291 = vmatpush1.msra.mxu0 %v273
        %292 = vmatprep.subr.mxu0 0.0
        %293 = vmatpush1.msra.mxu0 %v274
        %294 = vmatprep.subr.mxu0 0.0
        %295 = vmatpush1.msra.mxu0 %v275
        %296 = vmatprep.subr.mxu0 0.0
        %297 = vmatpush1.msra.mxu0 %v276
        %298 = vmatprep.subr.mxu0 0.0
        %299 = vmatpush1.msra.mxu0 %v277
        %300 = vmatprep.subr.mxu0 0.0
        %301 = vmatpush1.msra.mxu0 %v278
        %302 = vmatprep.subr.mxu0 0.0
        %303 = vmatpush1.msra.mxu0 %v279
        %304 = vmatprep.subr.mxu0 0.0
        %305 = vmatpush1.msra.mxu0 %v280
        %306 = vmatprep.subr.mxu0 0.0
        %307 = vmatpush1.msra.mxu0 %v281
        %308 = vmatprep.subr.mxu0 0.0
        %309 = vmatpush1.msra.mxu0 %v282
        %310 = vmatprep.subr.mxu0 0.0
        %311 = vmatpush1.msra.mxu0 %v283
        %312 = vmatprep.subr.mxu0 0.0
        %313 = vmatpush1.msra.mxu0 %v284
        %314 = vmatprep.subr.mxu0 0.0
        %315 = vmatpush1.msra.mxu0 %v285
        %316 = vmatprep.subr.mxu0 0.0
        %317 = vmatpush1.msra.mxu0 %v286
        %318 = vmatprep.subr.mxu0 0.0
        %319 = vmatpush1.msra.mxu0 %v287
        %320 = vmatprep.subr.mxu0 0.0
        %321 = vmatpush1.msra.mxu0 %v288
        %322 = vmatprep.subr.mxu0 0.0
        %323 = vmatpush1.msra.mxu0 0.0
        %324 = vmatprep.subr.mxu0 0.0
        %325 = vmatpush1.msra.mxu0 0.0
        %326 = vmatprep.subr.mxu0 0.0
        %327 = vmatpush1.msra.mxu0 0.0
        %328 = vmatprep.subr.mxu0 0.0
        %329 = vmatpush1.msra.mxu0 0.0
        %330 = vmatprep.subr.mxu0 0.0
        %331 = vmatpush1.msra.mxu0 0.0
        %332 = vmatprep.subr.mxu0 0.0
        %333 = vmatpush1.msra.mxu0 0.0
        %334 = vmatprep.subr.mxu0 0.0
        %335 = vmatpush1.msra.mxu0 0.0
        %336 = vmatprep.subr.mxu0 0.0
        %337 = vmatpush1.msra.mxu0 0.0
        %338 = vmatprep.subr.mxu0 0.0
        %339 = vmatpush1.msra.mxu0 0.0
        %340 = vmatprep.subr.mxu0 0.0
        %341 = vmatpush1.msra.mxu0 0.0
        %342 = vmatprep.subr.mxu0 0.0
        %343 = vmatpush1.msra.mxu0 0.0
        %344 = vmatprep.subr.mxu0 0.0
        %345 = vmatpush1.msra.mxu0 0.0
        %346 = vmatprep.subr.mxu0 0.0
        %347 = vmatpush1.msra.mxu0 0.0
        %348 = vmatprep.subr.mxu0 0.0
        %349 = vmatpush1.msra.mxu0 0.0
        %350 = vmatprep.subr.mxu0 0.0
        %351 = vmatpush1.msra.mxu0 0.0
        %352 = vmatprep.subr.mxu0 0.0
        %353 = vmatpush1.msra.mxu0 0.0
        %354 = vmatprep.mubr.f32.mxu0 0.0
        %355 = vmatmul.mubr.f32.gmra.mrb[0].mxu0 %v266
        %v356 = vpop.f32.mrb[0].mxu0
        %v357 = vadd.f32 0.0, %v356
        %v358 = vpop.f32.mrb[0].mxu0
        %359 = vdwg.mxu0
        %v360 = vadd.f32 %v289, %v357
        %361 = vst [vmem:[#allocation2] sm:$0xff] %v360
        %v362 = vld [vmem:[#allocation5 + $0x8] sm:$0xff]
        %s363 = sadd.s32 %s269, 1
        %s364 = sld [smem:[#allocation4 + %s363]]
        %s365 = smul.u32 %s364, 128
        %s366 = scalar_lea.vmem %s224, %s365 [#allocation8]
        %v367 = vld [vmem:[%s366] sm:$0xff]
        %v368 = vld [vmem:[%s366 + $0x8] sm:$0xff]
        %v369 = vld [vmem:[%s366 + $0x10] sm:$0xff]
        %v370 = vld [vmem:[%s366 + $0x18] sm:$0xff]
        %v371 = vld [vmem:[%s366 + $0x20] sm:$0xff]
        %v372 = vld [vmem:[%s366 + $0x28] sm:$0xff]
        %v373 = vld [vmem:[%s366 + $0x30] sm:$0xff]
        %v374 = vld [vmem:[%s366 + $0x38] sm:$0xff]
        %v375 = vld [vmem:[%s366 + $0x40] sm:$0xff]
        %v376 = vld [vmem:[%s366 + $0x48] sm:$0xff]
        %v377 = vld [vmem:[%s366 + $0x50] sm:$0xff]
        %v378 = vld [vmem:[%s366 + $0x58] sm:$0xff]
        %v379 = vld [vmem:[%s366 + $0x60] sm:$0xff]
        %v380 = vld [vmem:[%s366 + $0x68] sm:$0xff]
        %v381 = vld [vmem:[%s366 + $0x70] sm:$0xff]
        %v382 = vld [vmem:[%s366 + $0x78] sm:$0xff]
        %v383 = vld [vmem:[#allocation2] sm:$0xff]
        %384 = vmatprep.subr.mxu0 0.0
        %385 = vmatpush1.msra.mxu0 %v367
        %386 = vmatprep.subr.mxu0 0.0
        %387 = vmatpush1.msra.mxu0 %v368
        %388 = vmatprep.subr.mxu0 0.0
        %389 = vmatpush1.msra.mxu0 %v369
        %390 = vmatprep.subr.mxu0 0.0
        %391 = vmatpush1.msra.mxu0 %v370
        %392 = vmatprep.subr.mxu0 0.0
        %393 = vmatpush1.msra.mxu0 %v371
        %394 = vmatprep.subr.mxu0 0.0
        %395 = vmatpush1.msra.mxu0 %v372
        %396 = vmatprep.subr.mxu0 0.0
        %397 = vmatpush1.msra.mxu0 %v373
        %398 = vmatprep.subr.mxu0 0.0
        %399 = vmatpush1.msra.mxu0 %v374
        %400 = vmatprep.subr.mxu0 0.0
        %401 = vmatpush1.msra.mxu0 %v375
        %402 = vmatprep.subr.mxu0 0.0
        %403 = vmatpush1.msra.mxu0 %v376
        %404 = vmatprep.subr.mxu0 0.0
        %405 = vmatpush1.msra.mxu0 %v377
        %406 = vmatprep.subr.mxu0 0.0
        %407 = vmatpush1.msra.mxu0 %v378
        %408 = vmatprep.subr.mxu0 0.0
        %409 = vmatpush1.msra.mxu0 %v379
        %410 = vmatprep.subr.mxu0 0.0
        %411 = vmatpush1.msra.mxu0 %v380
        %412 = vmatprep.subr.mxu0 0.0
        %413 = vmatpush1.msra.mxu0 %v381
        %414 = vmatprep.subr.mxu0 0.0
        %415 = vmatpush1.msra.mxu0 %v382
        %416 = vmatprep.subr.mxu0 0.0
        %417 = vmatpush1.msra.mxu0 0.0
        %418 = vmatprep.subr.mxu0 0.0
        %419 = vmatpush1.msra.mxu0 0.0
        %420 = vmatprep.subr.mxu0 0.0
        %421 = vmatpush1.msra.mxu0 0.0
        %422 = vmatprep.subr.mxu0 0.0
        %423 = vmatpush1.msra.mxu0 0.0
        %424 = vmatprep.subr.mxu0 0.0
        %425 = vmatpush1.msra.mxu0 0.0
        %426 = vmatprep.subr.mxu0 0.0
        %427 = vmatpush1.msra.mxu0 0.0
        %428 = vmatprep.subr.mxu0 0.0
        %429 = vmatpush1.msra.mxu0 0.0
        %430 = vmatprep.subr.mxu0 0.0
        %431 = vmatpush1.msra.mxu0 0.0
        %432 = vmatprep.subr.mxu0 0.0
        %433 = vmatpush1.msra.mxu0 0.0
        %434 = vmatprep.subr.mxu0 0.0
        %435 = vmatpush1.msra.mxu0 0.0
        %436 = vmatprep.subr.mxu0 0.0
        %437 = vmatpush1.msra.mxu0 0.0
        %438 = vmatprep.subr.mxu0 0.0
        %439 = vmatpush1.msra.mxu0 0.0
        %440 = vmatprep.subr.mxu0 0.0
        %441 = vmatpush1.msra.mxu0 0.0
        %442 = vmatprep.subr.mxu0 0.0
        %443 = vmatpush1.msra.mxu0 0.0
        %444 = vmatprep.subr.mxu0 0.0
        %445 = vmatpush1.msra.mxu0 0.0
        %446 = vmatprep.subr.mxu0 0.0
        %447 = vmatpush1.msra.mxu0 0.0
        %448 = vmatprep.mubr.f32.mxu0 0.0
        %449 = vmatmul.mubr.f32.gmra.mrb[0].mxu0 %v362
        %v450 = vpop.f32.mrb[0].mxu0
        %v451 = vadd.f32 0.0, %v450
        %v452 = vpop.f32.mrb[0].mxu0
        %453 = vdwg.mxu0
        %v454 = vadd.f32 %v383, %v451
        %455 = vst [vmem:[#allocation2] sm:$0xff] %v454
        %v456 = vld [vmem:[#allocation5 + $0x10] sm:$0xff]
        %s457 = sadd.s32 %s269, 2
        %s458 = sld [smem:[#allocation4 + %s457]]
        %s459 = smul.u32 %s458, 128
        %s460 = scalar_lea.vmem %s224, %s459 [#allocation8]
        %v461 = vld [vmem:[%s460] sm:$0xff]
        %v462 = vld [vmem:[%s460 + $0x8] sm:$0xff]
        %v463 = vld [vmem:[%s460 + $0x10] sm:$0xff]
        %v464 = vld [vmem:[%s460 + $0x18] sm:$0xff]
        %v465 = vld [vmem:[%s460 + $0x20] sm:$0xff]
        %v466 = vld [vmem:[%s460 + $0x28] sm:$0xff]
        %v467 = vld [vmem:[%s460 + $0x30] sm:$0xff]
        %v468 = vld [vmem:[%s460 + $0x38] sm:$0xff]
        %v469 = vld [vmem:[%s460 + $0x40] sm:$0xff]
        %v470 = vld [vmem:[%s460 + $0x48] sm:$0xff]
        %v471 = vld [vmem:[%s460 + $0x50] sm:$0xff]
        %v472 = vld [vmem:[%s460 + $0x58] sm:$0xff]
        %v473 = vld [vmem:[%s460 + $0x60] sm:$0xff]
        %v474 = vld [vmem:[%s460 + $0x68] sm:$0xff]
        %v475 = vld [vmem:[%s460 + $0x70] sm:$0xff]
        %v476 = vld [vmem:[%s460 + $0x78] sm:$0xff]
        %v477 = vld [vmem:[#allocation2] sm:$0xff]
        %478 = vmatprep.subr.mxu0 0.0
        %479 = vmatpush1.msra.mxu0 %v461
        %480 = vmatprep.subr.mxu0 0.0
        %481 = vmatpush1.msra.mxu0 %v462
        %482 = vmatprep.subr.mxu0 0.0
        %483 = vmatpush1.msra.mxu0 %v463
        %484 = vmatprep.subr.mxu0 0.0
        %485 = vmatpush1.msra.mxu0 %v464
        %486 = vmatprep.subr.mxu0 0.0
        %487 = vmatpush1.msra.mxu0 %v465
        %488 = vmatprep.subr.mxu0 0.0
        %489 = vmatpush1.msra.mxu0 %v466
        %490 = vmatprep.subr.mxu0 0.0
        %491 = vmatpush1.msra.mxu0 %v467
        %492 = vmatprep.subr.mxu0 0.0
        %493 = vmatpush1.msra.mxu0 %v468
        %494 = vmatprep.subr.mxu0 0.0
        %495 = vmatpush1.msra.mxu0 %v469
        %496 = vmatprep.subr.mxu0 0.0
        %497 = vmatpush1.msra.mxu0 %v470
        %498 = vmatprep.subr.mxu0 0.0
        %499 = vmatpush1.msra.mxu0 %v471
        %500 = vmatprep.subr.mxu0 0.0
        %501 = vmatpush1.msra.mxu0 %v472
        %502 = vmatprep.subr.mxu0 0.0
        %503 = vmatpush1.msra.mxu0 %v473
        %504 = vmatprep.subr.mxu0 0.0
        %505 = vmatpush1.msra.mxu0 %v474
        %506 = vmatprep.subr.mxu0 0.0
        %507 = vmatpush1.msra.mxu0 %v475
        %508 = vmatprep.subr.mxu0 0.0
        %509 = vmatpush1.msra.mxu0 %v476
        %510 = vmatprep.subr.mxu0 0.0
        %511 = vmatpush1.msra.mxu0 0.0
        %512 = vmatprep.subr.mxu0 0.0
        %513 = vmatpush1.msra.mxu0 0.0
        %514 = vmatprep.subr.mxu0 0.0
        %515 = vmatpush1.msra.mxu0 0.0
        %516 = vmatprep.subr.mxu0 0.0
        %517 = vmatpush1.msra.mxu0 0.0
        %518 = vmatprep.subr.mxu0 0.0
        %519 = vmatpush1.msra.mxu0 0.0
        %520 = vmatprep.subr.mxu0 0.0
        %521 = vmatpush1.msra.mxu0 0.0
        %522 = vmatprep.subr.mxu0 0.0
        %523 = vmatpush1.msra.mxu0 0.0
        %524 = vmatprep.subr.mxu0 0.0
        %525 = vmatpush1.msra.mxu0 0.0
        %526 = vmatprep.subr.mxu0 0.0
        %527 = vmatpush1.msra.mxu0 0.0
        %528 = vmatprep.subr.mxu0 0.0
        %529 = vmatpush1.msra.mxu0 0.0
        %530 = vmatprep.subr.mxu0 0.0
        %531 = vmatpush1.msra.mxu0 0.0
        %532 = vmatprep.subr.mxu0 0.0
        %533 = vmatpush1.msra.mxu0 0.0
        %534 = vmatprep.subr.mxu0 0.0
        %535 = vmatpush1.msra.mxu0 0.0
        %536 = vmatprep.subr.mxu0 0.0
        %537 = vmatpush1.msra.mxu0 0.0
        %538 = vmatprep.subr.mxu0 0.0
        %539 = vmatpush1.msra.mxu0 0.0
        %540 = vmatprep.subr.mxu0 0.0
        %541 = vmatpush1.msra.mxu0 0.0
        %542 = vmatprep.mubr.f32.mxu0 0.0
        %543 = vmatmul.mubr.f32.gmra.mrb[0].mxu0 %v456
        %v544 = vpop.f32.mrb[0].mxu0
        %v545 = vadd.f32 0.0, %v544
        %v546 = vpop.f32.mrb[0].mxu0
        %547 = vdwg.mxu0
        %v548 = vadd.f32 %v477, %v545
        %549 = vst [vmem:[#allocation2] sm:$0xff] %v548
        %v550 = vld [vmem:[#allocation5 + $0x18] sm:$0xff]
        %s551 = sadd.s32 %s269, 3
        %s552 = sld [smem:[#allocation4 + %s551]]
        %s553 = smul.u32 %s552, 128
        %s554 = scalar_lea.vmem %s224, %s553 [#allocation8]
        %v555 = vld [vmem:[%s554] sm:$0xff]
        %v556 = vld [vmem:[%s554 + $0x8] sm:$0xff]
        %v557 = vld [vmem:[%s554 + $0x10] sm:$0xff]
        %v558 = vld [vmem:[%s554 + $0x18] sm:$0xff]
        %v559 = vld [vmem:[%s554 + $0x20] sm:$0xff]
        %v560 = vld [vmem:[%s554 + $0x28] sm:$0xff]
        %v561 = vld [vmem:[%s554 + $0x30] sm:$0xff]
        %v562 = vld [vmem:[%s554 + $0x38] sm:$0xff]
        %v563 = vld [vmem:[%s554 + $0x40] sm:$0xff]
        %v564 = vld [vmem:[%s554 + $0x48] sm:$0xff]
        %v565 = vld [vmem:[%s554 + $0x50] sm:$0xff]
        %v566 = vld [vmem:[%s554 + $0x58] sm:$0xff]
        %v567 = vld [vmem:[%s554 + $0x60] sm:$0xff]
        %v568 = vld [vmem:[%s554 + $0x68] sm:$0xff]
        %v569 = vld [vmem:[%s554 + $0x70] sm:$0xff]
        %v570 = vld [vmem:[%s554 + $0x78] sm:$0xff]
        %v571 = vld [vmem:[#allocation2] sm:$0xff]
        %572 = vmatprep.subr.mxu0 0.0
        %573 = vmatpush1.msra.mxu0 %v555
        %574 = vmatprep.subr.mxu0 0.0
        %575 = vmatpush1.msra.mxu0 %v556
        %576 = vmatprep.subr.mxu0 0.0
        %577 = vmatpush1.msra.mxu0 %v557
        %578 = vmatprep.subr.mxu0 0.0
        %579 = vmatpush1.msra.mxu0 %v558
        %580 = vmatprep.subr.mxu0 0.0
        %581 = vmatpush1.msra.mxu0 %v559
        %582 = vmatprep.subr.mxu0 0.0
        %583 = vmatpush1.msra.mxu0 %v560
        %584 = vmatprep.subr.mxu0 0.0
        %585 = vmatpush1.msra.mxu0 %v561
        %586 = vmatprep.subr.mxu0 0.0
        %587 = vmatpush1.msra.mxu0 %v562
        %588 = vmatprep.subr.mxu0 0.0
        %589 = vmatpush1.msra.mxu0 %v563
        %590 = vmatprep.subr.mxu0 0.0
        %591 = vmatpush1.msra.mxu0 %v564
        %592 = vmatprep.subr.mxu0 0.0
        %593 = vmatpush1.msra.mxu0 %v565
        %594 = vmatprep.subr.mxu0 0.0
        %595 = vmatpush1.msra.mxu0 %v566
        %596 = vmatprep.subr.mxu0 0.0
        %597 = vmatpush1.msra.mxu0 %v567
        %598 = vmatprep.subr.mxu0 0.0
        %599 = vmatpush1.msra.mxu0 %v568
        %600 = vmatprep.subr.mxu0 0.0
        %601 = vmatpush1.msra.mxu0 %v569
        %602 = vmatprep.subr.mxu0 0.0
        %603 = vmatpush1.msra.mxu0 %v570
        %604 = vmatprep.subr.mxu0 0.0
        %605 = vmatpush1.msra.mxu0 0.0
        %606 = vmatprep.subr.mxu0 0.0
        %607 = vmatpush1.msra.mxu0 0.0
        %608 = vmatprep.subr.mxu0 0.0
        %609 = vmatpush1.msra.mxu0 0.0
        %610 = vmatprep.subr.mxu0 0.0
        %611 = vmatpush1.msra.mxu0 0.0
        %612 = vmatprep.subr.mxu0 0.0
        %613 = vmatpush1.msra.mxu0 0.0
        %614 = vmatprep.subr.mxu0 0.0
        %615 = vmatpush1.msra.mxu0 0.0
        %616 = vmatprep.subr.mxu0 0.0
        %617 = vmatpush1.msra.mxu0 0.0
        %618 = vmatprep.subr.mxu0 0.0
        %619 = vmatpush1.msra.mxu0 0.0
        %620 = vmatprep.subr.mxu0 0.0
        %621 = vmatpush1.msra.mxu0 0.0
        %622 = vmatprep.subr.mxu0 0.0
        %623 = vmatpush1.msra.mxu0 0.0
        %624 = vmatprep.subr.mxu0 0.0
        %625 = vmatpush1.msra.mxu0 0.0
        %626 = vmatprep.subr.mxu0 0.0
        %627 = vmatpush1.msra.mxu0 0.0
        %628 = vmatprep.subr.mxu0 0.0
        %629 = vmatpush1.msra.mxu0 0.0
        %630 = vmatprep.subr.mxu0 0.0
        %631 = vmatpush1.msra.mxu0 0.0
        %632 = vmatprep.subr.mxu0 0.0
        %633 = vmatpush1.msra.mxu0 0.0
        %634 = vmatprep.subr.mxu0 0.0
        %635 = vmatpush1.msra.mxu0 0.0
        %636 = vmatprep.mubr.f32.mxu0 0.0
        %637 = vmatmul.mubr.f32.gmra.mrb[0].mxu0 %v550
        %v638 = vpop.f32.mrb[0].mxu0
        %v639 = vadd.f32 0.0, %v638
        %v640 = vpop.f32.mrb[0].mxu0
        %641 = vdwg.mxu0
        %v642 = vadd.f32 %v571, %v639
        %643 = vst [vmem:[#allocation2] sm:$0xff] %v642
        // Predicated region
        $region45: #{tpu_custom_call.1} parent=31 // pred_check
          %p644 = pneg %p254
        $region46: #{tpu_custom_call.1} parent=31 // pred_check_branch
          %646 = sbr.rel (%p644) target = $region48
        $region47: #{tpu_custom_call.1} parent=31 // pred_region
          %v647 = vld [vmem:[#allocation2] sm:$0xff]
          %648 = vst [vmem:[%s249] sm:$0xff] %v647
        $region48: #{tpu_custom_call.1} parent=31 // pred_fallthru
          _
        %s649 = sand.u32 %s135, 1
        %s650 = scalar_lea.sflag [#allocation7], %s649
        %s651 = sand.u32 %s135, 1
        %s652 = smul.addr %s651, 8
        %s653 = scalar_lea.vmem [#allocation10], %s652
        // Predicated region
        $region49: #{tpu_custom_call.1} parent=31 // pred_check
          %p654 = pneg %p145
        $region50: #{tpu_custom_call.1} parent=31 // pred_check_branch
          %656 = sbr.rel (%p654) target = $region52
        $region51: #{tpu_custom_call.1} parent=31 // pred_region
          %s658 = ssub.s32 128, 128
          %659 = vsyncadd %s650, %s658
          %s660 = smul.addr %s32, 2
          %s661 = sadd.s32 %s31, %s660
          %s662 = smul.addr %s661, 128
          %s663 = scalar_lea.hbm %s4, %s662
          %s665 = sshll.u32 %s653, 4
          %s666 = int_to_ptr.vmem [resolvable:$true] %s665
          %668 = dma.vmem_to_hbm [thread:$0]  %s666, 128, %s663, %s650
        $region52: #{tpu_custom_call.1} parent=31 // pred_fallthru
          _
      $region32: #{tpu_custom_call.1} parent=5 // pred_fallthru
        _
      %p669 = scmp.le.s32.totalorder 2, %s21
      // Predicated region
      $region53: #{tpu_custom_call.1} parent=5 // pred_check
        %p670 = pneg %p669
      $region54: #{tpu_custom_call.1} parent=5 // pred_check_branch
        %672 = sbr.rel (%p670) target = $region56
      $region55: #{tpu_custom_call.1} parent=5 // pred_region
        %s673 = ssub.s32 %s21, 2
        // Predicated region
        $region57: #{tpu_custom_call.1} parent=55 // pred_check
          %p674 = pneg %p151
        $region58: #{tpu_custom_call.1} parent=55 // pred_check_branch
          %676 = sbr.rel (%p674) target = $region60
        $region59: #{tpu_custom_call.1} parent=55 // pred_region
          %s677 = sand.u32 %s136, 1
          %s678 = scalar_lea.sflag [#allocation7], %s677
          %s679 = sand.u32 %s136, 1
          %s680 = smul.addr %s679, 8
          %s681 = scalar_lea.vmem [#allocation10], %s680
          %682 = dma.done %s678, 128
        $region60: #{tpu_custom_call.1} parent=55 // pred_fallthru
          _
      $region56: #{tpu_custom_call.1} parent=5 // pred_fallthru
        _
    $region6: #{tpu_custom_call.1} parent=1 // loop_footer
      %s25 = sadd.s32 1, %s21
    $region7: #{tpu_custom_call.1} parent=1 // loop_footer_branch
      %20 = sbr.rel target = $region3
    $region8: #{tpu_custom_call.1} parent=1 // loop_exit
      _
    %683 = vsyncpa [#allocation6], 1
    %s684 = scalar_lea.sflag [#allocation6], 1
    %685 = vsyncpa %s684, 1
    %686 = vsyncpa [#allocation9], 1
    %s687 = scalar_lea.sflag [#allocation9], 1
    %688 = vsyncpa %s687, 1
    %689 = vsyncpa [#allocation7], 1
    %s690 = scalar_lea.sflag [#allocation7], 1
    %691 = vsyncpa %s690, 1

</llo_original>
